<compile_context>
chip_gen: v7x
topology: tpu7x:2x2x1
jax: 0.10.0
libtpu: 0.0.40
codegen_flags: <defaults>
</compile_context>

<pallas_src>
from functools import partial

import jax
import jax.numpy as jnp
from jax.experimental import pallas as pl
from jax.experimental.pallas import tpu as pltpu

LANE = 128  # TPU lane width; features/channels are padded to this


# ----------------------------- Pallas kernel --------------------------------

def _gnn3_fused_kernel(a_ref, x_ref, wl_ref, wr_ref, b_ref, o_ref, h_ref, *,
                       n_layers):
    # a_ref : (N, N)    bf16  row-normalized adjacency (mean aggregation)
    # x_ref : (N, P)    bf16  node features, zero-padded to P=128 lanes
    # wl_ref: (L, P, P) bf16  neighbor weights (lin_l.weight.T, zero-padded)
    # wr_ref: (L, P, P) bf16  root weights     (lin_r.weight.T, zero-padded)
    # b_ref : (L, 1, P) f32   biases (zero-padded)
    # o_ref : (N, P)    f32   output (padded channels stay 0)
    # h_ref : (N, P)    f32   VMEM scratch: activation carried across layers
    a = a_ref[...]
    h_ref[...] = x_ref[...].astype(jnp.float32)
    for l in range(n_layers):          # static unroll: all layers are (P, P)
        h = h_ref[...].astype(jnp.bfloat16)
        # Reordered chain: A @ (h @ Wl) == (A @ h) @ Wl, but the big (N,N)
        # matmul now produces a lane-dense (P=128 wide) result.
        xw = jnp.dot(h, wl_ref[l], preferred_element_type=jnp.float32)
        agg = jnp.dot(a, xw.astype(jnp.bfloat16),
                      preferred_element_type=jnp.float32)
        root = jnp.dot(h, wr_ref[l], preferred_element_type=jnp.float32)
        h_ref[...] = jnp.maximum(agg + root + b_ref[l], 0.0)
    o_ref[...] = h_ref[...].astype(o_ref.dtype)


def gnn_encoder_pallas(a, x, params):
    """Fused 3-layer SAGEConv(mean)+ReLU forward. a: (N,N) f32, x: (N,F) f32."""
    n, f_in = x.shape
    c_out = params[0][0].shape[1]
    n_layers = len(params)
    p = LANE

    # Zero-pad features / channels to the 128-lane width and stack the layers.
    xp = jnp.zeros((n, p), jnp.float32).at[:, :f_in].set(x).astype(jnp.bfloat16)
    wls, wrs, bs = [], [], []
    for (wl, wr, b) in params:
        wls.append(jnp.zeros((p, p), jnp.float32)
                   .at[:wl.shape[0], :wl.shape[1]].set(wl))
        wrs.append(jnp.zeros((p, p), jnp.float32)
                   .at[:wr.shape[0], :wr.shape[1]].set(wr))
        bs.append(jnp.zeros((p,), jnp.float32).at[:b.shape[0]].set(b))
    wl_stack = jnp.stack(wls).astype(jnp.bfloat16)            # (L, P, P)
    wr_stack = jnp.stack(wrs).astype(jnp.bfloat16)            # (L, P, P)
    b_stack = jnp.stack(bs).reshape(n_layers, 1, p)           # (L, 1, P) f32
    a_bf16 = a.astype(jnp.bfloat16)

    out = pl.pallas_call(
        partial(_gnn3_fused_kernel, n_layers=n_layers),
        out_shape=jax.ShapeDtypeStruct((n, p), jnp.float32),
        grid_spec=pltpu.PrefetchScalarGridSpec(
            num_scalar_prefetch=0,
            grid=(1,),
            in_specs=[
                pl.BlockSpec((n, n), lambda i: (0, 0)),               # A
                pl.BlockSpec((n, p), lambda i: (0, 0)),               # X (padded)
                pl.BlockSpec((n_layers, p, p), lambda i: (0, 0, 0)),  # W_l stack
                pl.BlockSpec((n_layers, p, p), lambda i: (0, 0, 0)),  # W_r stack
                pl.BlockSpec((n_layers, 1, p), lambda i: (0, 0, 0)),  # bias stack
            ],
            out_specs=pl.BlockSpec((n, p), lambda i: (0, 0)),
            scratch_shapes=[pltpu.VMEM((n, p), jnp.float32)],
        ),
        compiler_params=pltpu.CompilerParams(
            dimension_semantics=("arbitrary",)),
    )(a_bf16, xp, wl_stack, wr_stack, b_stack)
    return out[:, :c_out]


# ------------------------------ Glue (plain JAX) -----------------------------

def build_mean_adj(edge_index, num_nodes):
    """Row-normalized dense adjacency: A[i, j] = (#edges j->i) / deg_in(i)."""
    src, dst = edge_index[0], edge_index[1]
    a = jnp.zeros((num_nodes, num_nodes), jnp.float32)
    a = a.at[dst, src].add(1.0)
    deg = a.sum(axis=1, keepdims=True)
    return a / jnp.where(deg > 0, deg, 1.0)


def init_sage_params(key, in_ch, out_ch):
    k1, k2, k3 = jax.random.split(key, 3)
    scale = 1.0 / jnp.sqrt(jnp.float32(in_ch))
    wl = jax.random.uniform(k1, (in_ch, out_ch), jnp.float32, -scale, scale)
    wr = jax.random.uniform(k2, (in_ch, out_ch), jnp.float32, -scale, scale)
    b = jax.random.uniform(k3, (out_ch,), jnp.float32, -scale, scale)
    return wl, wr, b


def gnn_encoder_forward(x, edge_index, params):
    """Forward of GNNEncoder: conv1.relu -> conv2.relu -> conv3.relu."""
    a = build_mean_adj(edge_index, x.shape[0])
    return gnn_encoder_pallas(a, x, params)


def gnn_encoder_reference(x, edge_index, params):
    """Plain-JAX f32 reference for validation."""
    a = build_mean_adj(edge_index, x.shape[0])
    h = x
    for (wl, wr, b) in params:
        h = jnp.maximum((a @ h) @ wl + h @ wr + b, 0.0)
    return h


# --------------------------------- Main --------------------------------------

if __name__ == "__main__":
    key = jax.random.PRNGKey(0)
    k_x, k_e, k_p1, k_p2, k_p3 = jax.random.split(key, 5)

    N, F_IN, C_OUT, E = 64, 16, 32, 256

    x = jax.random.normal(k_x, (N, F_IN), jnp.float32)
    edge_index = jax.random.randint(k_e, (2, E), 0, N, jnp.int32)

    params = [
        init_sage_params(k_p1, F_IN, C_OUT),   # conv1: (-1,-1) -> C_OUT
        init_sage_params(k_p2, C_OUT, C_OUT),  # conv2
        init_sage_params(k_p3, C_OUT, C_OUT),  # conv3
    ]

    out = gnn_encoder_forward(x, edge_index, params)
    jax.block_until_ready(out)
    assert out.shape == (N, C_OUT)

    ref = gnn_encoder_reference(x, edge_index, params)
    err = float(jnp.max(jnp.abs(out - ref)))
    # bf16 operands with f32 accumulation: loose tolerance vs. f32 reference.
    assert err < 0.1, f"max abs error vs f32 reference too large: {err}"
    print("KERNEL_OK")
</pallas_src>

<mosaic_0001>
module attributes {stable_mosaic.version = 11 : i64} {
  func.func @_gnn3_fused_kernel(%arg0: i32, %arg1: memref<64x64xbf16, #tpu.memory_space<vmem>>, %arg2: memref<64x128xbf16, #tpu.memory_space<vmem>>, %arg3: memref<3x128x128xbf16, #tpu.memory_space<vmem>>, %arg4: memref<3x128x128xbf16, #tpu.memory_space<vmem>>, %arg5: memref<3x1x128xf32, #tpu.memory_space<vmem>>, %arg6: memref<64x128xf32, #tpu.memory_space<vmem>>, %arg7: memref<64x128xf32, #tpu.memory_space<vmem>>) attributes {dimension_semantics = [#tpu.dimension_semantics<arbitrary>], iteration_bounds = array<i64: 1>, scalar_prefetch = 0 : i64, scratch_operands = 1 : i64, tpu.core_type = #tpu.core_type<tc>, window_params = [{pipeline_mode = #tpu.pipeline_mode<synchronous>, transform_indices = @transform_0, window_bounds = array<i64: 64, 64>}, {pipeline_mode = #tpu.pipeline_mode<synchronous>, transform_indices = @transform_1, window_bounds = array<i64: 64, 128>}, {pipeline_mode = #tpu.pipeline_mode<synchronous>, transform_indices = @transform_2, window_bounds = array<i64: 3, 128, 128>}, {pipeline_mode = #tpu.pipeline_mode<synchronous>, transform_indices = @transform_3, window_bounds = array<i64: 3, 128, 128>}, {pipeline_mode = #tpu.pipeline_mode<synchronous>, transform_indices = @transform_4, window_bounds = array<i64: 3, 1, 128>}, {pipeline_mode = #tpu.pipeline_mode<synchronous>, transform_indices = @transform_5, window_bounds = array<i64: 64, 128>}]} {
    %c0 = arith.constant 0 : index
    %c0_0 = arith.constant 0 : index
    %0 = vector.load %arg1[%c0, %c0_0] : memref<64x64xbf16, #tpu.memory_space<vmem>>, vector<64x64xbf16>
    %c0_1 = arith.constant 0 : index
    %c0_2 = arith.constant 0 : index
    %1 = vector.load %arg2[%c0_1, %c0_2] : memref<64x128xbf16, #tpu.memory_space<vmem>>, vector<64x128xbf16>
    %2 = arith.extf %1 : vector<64x128xbf16> to vector<64x128xf32>
    %c0_3 = arith.constant 0 : index
    %c0_4 = arith.constant 0 : index
    %3 = vector.load %arg7[%c0_3, %c0_4] : memref<64x128xf32, #tpu.memory_space<vmem>>, vector<64x128xf32>
    tpu.vector_store %arg7[%c0_3, %c0_4], %2 {strides = array<i32>} : memref<64x128xf32, #tpu.memory_space<vmem>>, vector<64x128xf32>,
    %c0_5 = arith.constant 0 : index
    %c0_6 = arith.constant 0 : index
    %4 = vector.load %arg7[%c0_5, %c0_6] : memref<64x128xf32, #tpu.memory_space<vmem>>, vector<64x128xf32>
    %5 = arith.truncf %4 : vector<64x128xf32> to vector<64x128xbf16>
    %c0_7 = arith.constant 0 : index
    %c0_8 = arith.constant 0 : index
    %c0_9 = arith.constant 0 : index
    %6 = vector.load %arg3[%c0_7, %c0_8, %c0_9] : memref<3x128x128xbf16, #tpu.memory_space<vmem>>, vector<1x128x128xbf16>
    %7 = vector.shape_cast %6 : vector<1x128x128xbf16> to vector<128x128xbf16>
    %cst = arith.constant dense<0.000000e+00> : vector<64x128xf32>
    %8 = tpu.matmul %5, %7, %cst {dimension_numbers = #tpu.dot_dimension_numbers<[1], [0], [0], [1], [0, 0, 1, 1], [], []>} : vector<64x128xbf16>, vector<128x128xbf16>, vector<64x128xf32> -> vector<64x128xf32>
    %9 = arith.truncf %8 : vector<64x128xf32> to vector<64x128xbf16>
    %cst_10 = arith.constant dense<0.000000e+00> : vector<64x128xf32>
    %10 = tpu.matmul %0, %9, %cst_10 {dimension_numbers = #tpu.dot_dimension_numbers<[1], [0], [0], [1], [0, 0, 1, 1], [], []>} : vector<64x64xbf16>, vector<64x128xbf16>, vector<64x128xf32> -> vector<64x128xf32>
    %c0_11 = arith.constant 0 : index
    %c0_12 = arith.constant 0 : index
    %c0_13 = arith.constant 0 : index
    %11 = vector.load %arg4[%c0_11, %c0_12, %c0_13] : memref<3x128x128xbf16, #tpu.memory_space<vmem>>, vector<1x128x128xbf16>
    %12 = vector.shape_cast %11 : vector<1x128x128xbf16> to vector<128x128xbf16>
    %cst_14 = arith.constant dense<0.000000e+00> : vector<64x128xf32>
    %13 = tpu.matmul %5, %12, %cst_14 {dimension_numbers = #tpu.dot_dimension_numbers<[1], [0], [0], [1], [0, 0, 1, 1], [], []>} : vector<64x128xbf16>, vector<128x128xbf16>, vector<64x128xf32> -> vector<64x128xf32>
    %14 = arith.addf %10, %13 : vector<64x128xf32>
    %c0_15 = arith.constant 0 : index
    %c0_16 = arith.constant 0 : index
    %c0_17 = arith.constant 0 : index
    %15 = vector.load %arg5[%c0_15, %c0_16, %c0_17] : memref<3x1x128xf32, #tpu.memory_space<vmem>>, vector<1x1x128xf32>
    %16 = vector.shape_cast %15 : vector<1x1x128xf32> to vector<1x128xf32>
    %17 = vector.broadcast %16 : vector<1x128xf32> to vector<64x128xf32>
    %18 = arith.addf %14, %17 : vector<64x128xf32>
    %cst_18 = arith.constant 0.000000e+00 : f32
    %19 = vector.broadcast %cst_18 : f32 to vector<64x128xf32>
    %20 = arith.maximumf %18, %19 : vector<64x128xf32>
    %c0_19 = arith.constant 0 : index
    %c0_20 = arith.constant 0 : index
    %21 = vector.load %arg7[%c0_19, %c0_20] : memref<64x128xf32, #tpu.memory_space<vmem>>, vector<64x128xf32>
    tpu.vector_store %arg7[%c0_19, %c0_20], %20 {strides = array<i32>} : memref<64x128xf32, #tpu.memory_space<vmem>>, vector<64x128xf32>,
    %c0_21 = arith.constant 0 : index
    %c0_22 = arith.constant 0 : index
    %22 = vector.load %arg7[%c0_21, %c0_22] : memref<64x128xf32, #tpu.memory_space<vmem>>, vector<64x128xf32>
    %23 = arith.truncf %22 : vector<64x128xf32> to vector<64x128xbf16>
    %c1 = arith.constant 1 : index
    %c0_23 = arith.constant 0 : index
    %c0_24 = arith.constant 0 : index
    %24 = vector.load %arg3[%c1, %c0_23, %c0_24] : memref<3x128x128xbf16, #tpu.memory_space<vmem>>, vector<1x128x128xbf16>
    %25 = vector.shape_cast %24 : vector<1x128x128xbf16> to vector<128x128xbf16>
    %cst_25 = arith.constant dense<0.000000e+00> : vector<64x128xf32>
    %26 = tpu.matmul %23, %25, %cst_25 {dimension_numbers = #tpu.dot_dimension_numbers<[1], [0], [0], [1], [0, 0, 1, 1], [], []>} : vector<64x128xbf16>, vector<128x128xbf16>, vector<64x128xf32> -> vector<64x128xf32>
    %27 = arith.truncf %26 : vector<64x128xf32> to vector<64x128xbf16>
    %cst_26 = arith.constant dense<0.000000e+00> : vector<64x128xf32>
    %28 = tpu.matmul %0, %27, %cst_26 {dimension_numbers = #tpu.dot_dimension_numbers<[1], [0], [0], [1], [0, 0, 1, 1], [], []>} : vector<64x64xbf16>, vector<64x128xbf16>, vector<64x128xf32> -> vector<64x128xf32>
    %c1_27 = arith.constant 1 : index
    %c0_28 = arith.constant 0 : index
    %c0_29 = arith.constant 0 : index
    %29 = vector.load %arg4[%c1_27, %c0_28, %c0_29] : memref<3x128x128xbf16, #tpu.memory_space<vmem>>, vector<1x128x128xbf16>
    %30 = vector.shape_cast %29 : vector<1x128x128xbf16> to vector<128x128xbf16>
    %cst_30 = arith.constant dense<0.000000e+00> : vector<64x128xf32>
    %31 = tpu.matmul %23, %30, %cst_30 {dimension_numbers = #tpu.dot_dimension_numbers<[1], [0], [0], [1], [0, 0, 1, 1], [], []>} : vector<64x128xbf16>, vector<128x128xbf16>, vector<64x128xf32> -> vector<64x128xf32>
    %32 = arith.addf %28, %31 : vector<64x128xf32>
    %c1_31 = arith.constant 1 : index
    %c0_32 = arith.constant 0 : index
    %c0_33 = arith.constant 0 : index
    %33 = vector.load %arg5[%c1_31, %c0_32, %c0_33] : memref<3x1x128xf32, #tpu.memory_space<vmem>>, vector<1x1x128xf32>
    %34 = vector.shape_cast %33 : vector<1x1x128xf32> to vector<1x128xf32>
    %35 = vector.broadcast %34 : vector<1x128xf32> to vector<64x128xf32>
    %36 = arith.addf %32, %35 : vector<64x128xf32>
    %cst_34 = arith.constant 0.000000e+00 : f32
    %37 = vector.broadcast %cst_34 : f32 to vector<64x128xf32>
    %38 = arith.maximumf %36, %37 : vector<64x128xf32>
    %c0_35 = arith.constant 0 : index
    %c0_36 = arith.constant 0 : index
    %39 = vector.load %arg7[%c0_35, %c0_36] : memref<64x128xf32, #tpu.memory_space<vmem>>, vector<64x128xf32>
    tpu.vector_store %arg7[%c0_35, %c0_36], %38 {strides = array<i32>} : memref<64x128xf32, #tpu.memory_space<vmem>>, vector<64x128xf32>,
    %c0_37 = arith.constant 0 : index
    %c0_38 = arith.constant 0 : index
    %40 = vector.load %arg7[%c0_37, %c0_38] : memref<64x128xf32, #tpu.memory_space<vmem>>, vector<64x128xf32>
    %41 = arith.truncf %40 : vector<64x128xf32> to vector<64x128xbf16>
    %c2 = arith.constant 2 : index
    %c0_39 = arith.constant 0 : index
    %c0_40 = arith.constant 0 : index
    %42 = vector.load %arg3[%c2, %c0_39, %c0_40] : memref<3x128x128xbf16, #tpu.memory_space<vmem>>, vector<1x128x128xbf16>
    %43 = vector.shape_cast %42 : vector<1x128x128xbf16> to vector<128x128xbf16>
    %cst_41 = arith.constant dense<0.000000e+00> : vector<64x128xf32>
    %44 = tpu.matmul %41, %43, %cst_41 {dimension_numbers = #tpu.dot_dimension_numbers<[1], [0], [0], [1], [0, 0, 1, 1], [], []>} : vector<64x128xbf16>, vector<128x128xbf16>, vector<64x128xf32> -> vector<64x128xf32>
    %45 = arith.truncf %44 : vector<64x128xf32> to vector<64x128xbf16>
    %cst_42 = arith.constant dense<0.000000e+00> : vector<64x128xf32>
    %46 = tpu.matmul %0, %45, %cst_42 {dimension_numbers = #tpu.dot_dimension_numbers<[1], [0], [0], [1], [0, 0, 1, 1], [], []>} : vector<64x64xbf16>, vector<64x128xbf16>, vector<64x128xf32> -> vector<64x128xf32>
    %c2_43 = arith.constant 2 : index
    %c0_44 = arith.constant 0 : index
    %c0_45 = arith.constant 0 : index
    %47 = vector.load %arg4[%c2_43, %c0_44, %c0_45] : memref<3x128x128xbf16, #tpu.memory_space<vmem>>, vector<1x128x128xbf16>
    %48 = vector.shape_cast %47 : vector<1x128x128xbf16> to vector<128x128xbf16>
    %cst_46 = arith.constant dense<0.000000e+00> : vector<64x128xf32>
    %49 = tpu.matmul %41, %48, %cst_46 {dimension_numbers = #tpu.dot_dimension_numbers<[1], [0], [0], [1], [0, 0, 1, 1], [], []>} : vector<64x128xbf16>, vector<128x128xbf16>, vector<64x128xf32> -> vector<64x128xf32>
    %50 = arith.addf %46, %49 : vector<64x128xf32>
    %c2_47 = arith.constant 2 : index
    %c0_48 = arith.constant 0 : index
    %c0_49 = arith.constant 0 : index
    %51 = vector.load %arg5[%c2_47, %c0_48, %c0_49] : memref<3x1x128xf32, #tpu.memory_space<vmem>>, vector<1x1x128xf32>
    %52 = vector.shape_cast %51 : vector<1x1x128xf32> to vector<1x128xf32>
    %53 = vector.broadcast %52 : vector<1x128xf32> to vector<64x128xf32>
    %54 = arith.addf %50, %53 : vector<64x128xf32>
    %cst_50 = arith.constant 0.000000e+00 : f32
    %55 = vector.broadcast %cst_50 : f32 to vector<64x128xf32>
    %56 = arith.maximumf %54, %55 : vector<64x128xf32>
    %c0_51 = arith.constant 0 : index
    %c0_52 = arith.constant 0 : index
    %57 = vector.load %arg7[%c0_51, %c0_52] : memref<64x128xf32, #tpu.memory_space<vmem>>, vector<64x128xf32>
    tpu.vector_store %arg7[%c0_51, %c0_52], %56 {strides = array<i32>} : memref<64x128xf32, #tpu.memory_space<vmem>>, vector<64x128xf32>,
    %c0_53 = arith.constant 0 : index
    %c0_54 = arith.constant 0 : index
    %58 = vector.load %arg7[%c0_53, %c0_54] : memref<64x128xf32, #tpu.memory_space<vmem>>, vector<64x128xf32>
    %c0_55 = arith.constant 0 : index
    %c0_56 = arith.constant 0 : index
    %59 = vector.load %arg6[%c0_55, %c0_56] : memref<64x128xf32, #tpu.memory_space<vmem>>, vector<64x128xf32>
    tpu.vector_store %arg6[%c0_55, %c0_56], %58 {strides = array<i32>} : memref<64x128xf32, #tpu.memory_space<vmem>>, vector<64x128xf32>,
    return
  }
  func.func @transform_0(%arg0: i32) -> (i32, i32) {
    %c0_i32 = arith.constant 0 : i32
    %c0_i32_0 = arith.constant 0 : i32
    %c0_i32_1 = arith.constant 0 : i32
    return %c0_i32, %c0_i32_0 : i32, i32
  }
  func.func @transform_1(%arg0: i32) -> (i32, i32) {
    %c0_i32 = arith.constant 0 : i32
    %c0_i32_0 = arith.constant 0 : i32
    %c0_i32_1 = arith.constant 0 : i32
    return %c0_i32, %c0_i32_0 : i32, i32
  }
  func.func @transform_2(%arg0: i32) -> (i32, i32, i32) {
    %c0_i32 = arith.constant 0 : i32
    %c0_i32_0 = arith.constant 0 : i32
    %c0_i32_1 = arith.constant 0 : i32
    %c0_i32_2 = arith.constant 0 : i32
    return %c0_i32, %c0_i32_0, %c0_i32_1 : i32, i32, i32
  }
  func.func @transform_3(%arg0: i32) -> (i32, i32, i32) {
    %c0_i32 = arith.constant 0 : i32
    %c0_i32_0 = arith.constant 0 : i32
    %c0_i32_1 = arith.constant 0 : i32
    %c0_i32_2 = arith.constant 0 : i32
    return %c0_i32, %c0_i32_0, %c0_i32_1 : i32, i32, i32
  }
  func.func @transform_4(%arg0: i32) -> (i32, i32, i32) {
    %c0_i32 = arith.constant 0 : i32
    %c0_i32_0 = arith.constant 0 : i32
    %c0_i32_1 = arith.constant 0 : i32
    %c0_i32_2 = arith.constant 0 : i32
    return %c0_i32, %c0_i32_0, %c0_i32_1 : i32, i32, i32
  }
  func.func @transform_5(%arg0: i32) -> (i32, i32) {
    %c0_i32 = arith.constant 0 : i32
    %c0_i32_0 = arith.constant 0 : i32
    %c0_i32_1 = arith.constant 0 : i32
    return %c0_i32, %c0_i32_0 : i32, i32
  }
}

</mosaic_0001>

<llo_original>
// kernel: tpu_custom_call.1
$region0: #{tpu_custom_call.1}
  #allocation0 [shape = 'u32[]', space=smem, size = 0x4, offset = 0x4, fixed_abs, tag = 'smem constant byte address 0x4 - core index']
  #allocation1 [shape = 'u32[144,128]{1,0:T(1,128)}', space=vmem, size = 0x12000, scoped, tag = 'internal scratch']
  #allocation2 [shape = 'f32[64,128]{1,0:T(8,128)}', space=vmem, size = 0x8000, scoped, tag = 'scratch operand']
  %s0 = inlined_call_operand.hbm [shape: bf16[64,64], index: 0, kind: input, shape index: {}]
  %s1 = inlined_call_operand.hbm [shape: bf16[64,128], index: 1, kind: input, shape index: {}]
  %s2 = inlined_call_operand.hbm [shape: bf16[3,128,128], index: 2, kind: input, shape index: {}]
  %s3 = inlined_call_operand.hbm [shape: bf16[3,128,128], index: 3, kind: input, shape index: {}]
  %s4 = inlined_call_operand.vmem [shape: f32[3,1,128], index: 4, kind: input, shape index: {}]
  %s5 = inlined_call_operand.hbm [shape: f32[64,128], index: 5, kind: output, shape index: {}]
  %s6 = sld [smem:[#allocation0]]
  $region46: #{tpu_custom_call.1} parent=0
    _
  %s8 = ssub.s32 1, %s6
  %s9 = scalar_select 0, %s8, %s6
  $region1: #{tpu_custom_call.1} parent=0
    #allocation3 [shape = 'u8[16384]{0}', space=vmem, size = 0x4000, scoped, tag = 'input window, operand 0, single buffered']
    #allocation4 [shape = 's32[1]{0}', space=sflag, size = 0x4, scoped, tag = 'scoped memory for tpu_custom_call.1']
    #allocation5 [shape = 's32[1]{0}', space=sflag, size = 0x4, scoped, tag = 'scoped memory for tpu_custom_call.1']
    #allocation6 [shape = 'u8[16384]{0}', space=vmem, size = 0x4000, scoped, tag = 'input window, operand 1, single buffered']
    #allocation7 [shape = 's32[1]{0}', space=sflag, size = 0x4, scoped, tag = 'scoped memory for tpu_custom_call.1']
    #allocation8 [shape = 'u8[98304]{0}', space=vmem, size = 0x18000, scoped, tag = 'input window, operand 2, single buffered']
    #allocation9 [shape = 'u8[98304]{0}', space=vmem, size = 0x18000, scoped, tag = 'input window, operand 3, single buffered']
    #allocation10 [shape = 's32[1]{0}', space=sflag, size = 0x4, scoped, tag = 'scoped memory for tpu_custom_call.1']
    #allocation11 [shape = 'u8[32768]{0}', space=vmem, size = 0x8000, scoped, tag = 'output window, operand 0, single buffered']
    %10 = vsyncpa [#allocation4], 0
    %11 = vsyncpa [#allocation7], 0
    %12 = vsyncpa [#allocation10], 0
    %13 = vsyncpa [#allocation5], 0
    // Predicated region
    $region2: #{tpu_custom_call.1} parent=1 // pred_check
      _
    $region3: #{tpu_custom_call.1} parent=1 // pred_check_branch
      %15 = sbr.rel (0) target = $region5
    $region4: #{tpu_custom_call.1} parent=1 // pred_region
      %s17 = ssub.s32 512, 512
      %18 = vsyncadd [#allocation4], %s17
      %s19 = sshll.u32 [#allocation3], 4
      %s20 = int_to_ptr.vmem [resolvable:$true] %s19
      %25 = dma.hbm_to_vmem [thread:$0]  %s0, 512, %s20, [#allocation4], 64, 64, 4
    $region5: #{tpu_custom_call.1} parent=1 // pred_fallthru
      _
    // Predicated region
    $region6: #{tpu_custom_call.1} parent=1 // pred_check
      _
    $region7: #{tpu_custom_call.1} parent=1 // pred_check_branch
      %27 = sbr.rel (0) target = $region9
    $region8: #{tpu_custom_call.1} parent=1 // pred_region
      %s29 = ssub.s32 512, 512
      %30 = vsyncadd [#allocation7], %s29
      %s31 = sshll.u32 [#allocation6], 4
      %s32 = int_to_ptr.vmem [resolvable:$true] %s31
      %37 = dma.hbm_to_vmem [thread:$0]  %s1, 512, %s32, [#allocation7], 64, 64, 4
    $region9: #{tpu_custom_call.1} parent=1 // pred_fallthru
      _
    // Predicated region
    $region10: #{tpu_custom_call.1} parent=1 // pred_check
      _
    $region11: #{tpu_custom_call.1} parent=1 // pred_check_branch
      %39 = sbr.rel (0) target = $region13
    $region12: #{tpu_custom_call.1} parent=1 // pred_region
      %s41 = ssub.s32 3072, 3072
      %42 = vsyncadd [#allocation7], %s41
      %s43 = sshll.u32 [#allocation8], 4
      %s44 = int_to_ptr.vmem [resolvable:$true] %s43
      %49 = dma.hbm_to_vmem [thread:$0]  %s2, 3072, %s44, [#allocation7], 64, 64, 4
    $region13: #{tpu_custom_call.1} parent=1 // pred_fallthru
      _
    // Predicated region
    $region14: #{tpu_custom_call.1} parent=1 // pred_check
      _
    $region15: #{tpu_custom_call.1} parent=1 // pred_check_branch
      %51 = sbr.rel (0) target = $region17
    $region16: #{tpu_custom_call.1} parent=1 // pred_region
      %s53 = ssub.s32 3072, 3072
      %54 = vsyncadd [#allocation10], %s53
      %s55 = sshll.u32 [#allocation9], 4
      %s56 = int_to_ptr.vmem [resolvable:$true] %s55
      %61 = dma.hbm_to_vmem [thread:$0]  %s3, 3072, %s56, [#allocation10], 64, 64, 4
    $region17: #{tpu_custom_call.1} parent=1 // pred_fallthru
      _
    // Predicated region
    $region18: #{tpu_custom_call.1} parent=1 // pred_check
      _
    $region19: #{tpu_custom_call.1} parent=1 // pred_check_branch
      %63 = sbr.rel (0) target = $region21
    $region20: #{tpu_custom_call.1} parent=1 // pred_region
      _
    $region21: #{tpu_custom_call.1} parent=1 // pred_fallthru
      _
    // Predicated region
    $region22: #{tpu_custom_call.1} parent=1 // pred_check
      _
    $region23: #{tpu_custom_call.1} parent=1 // pred_check_branch
      %65 = sbr.rel (0) target = $region25
    $region24: #{tpu_custom_call.1} parent=1 // pred_region
      %66 = dma.done [#allocation4], 512
    $region25: #{tpu_custom_call.1} parent=1 // pred_fallthru
      _
    // Predicated region
    $region26: #{tpu_custom_call.1} parent=1 // pred_check
      _
    $region27: #{tpu_custom_call.1} parent=1 // pred_check_branch
      %68 = sbr.rel (0) target = $region29
    $region28: #{tpu_custom_call.1} parent=1 // pred_region
      %69 = dma.done [#allocation7], 512
    $region29: #{tpu_custom_call.1} parent=1 // pred_fallthru
      _
    // Predicated region
    $region30: #{tpu_custom_call.1} parent=1 // pred_check
      _
    $region31: #{tpu_custom_call.1} parent=1 // pred_check_branch
      %71 = sbr.rel (0) target = $region33
    $region32: #{tpu_custom_call.1} parent=1 // pred_region
      %72 = dma.done [#allocation7], 3072
    $region33: #{tpu_custom_call.1} parent=1 // pred_fallthru
      _
    // Predicated region
    $region34: #{tpu_custom_call.1} parent=1 // pred_check
      _
    $region35: #{tpu_custom_call.1} parent=1 // pred_check_branch
      %74 = sbr.rel (0) target = $region37
    $region36: #{tpu_custom_call.1} parent=1 // pred_region
      %75 = dma.done [#allocation10], 3072
    $region37: #{tpu_custom_call.1} parent=1 // pred_fallthru
      _
    %v77 = vld [vmem:[#allocation3] sm:$0xf]
    %v78 = vld [vmem:[#allocation3 + $0x4] sm:$0xf]
    %v79 = vld [vmem:[#allocation3 + $0x8] sm:$0xf]
    %v80 = vld [vmem:[#allocation3 + $0xc] sm:$0xf]
    %v81 = vld [vmem:[#allocation3 + $0x10] sm:$0xf]
    %v82 = vld [vmem:[#allocation3 + $0x14] sm:$0xf]
    %v83 = vld [vmem:[#allocation3 + $0x18] sm:$0xf]
    %v84 = vld [vmem:[#allocation3 + $0x1c] sm:$0xf]
    %v85 = vld [vmem:[#allocation6] sm:$0xf]
    %v86 = vld [vmem:[#allocation6 + $0x4] sm:$0xf]
    %v87 = vld [vmem:[#allocation6 + $0x8] sm:$0xf]
    %v88 = vld [vmem:[#allocation6 + $0xc] sm:$0xf]
    %v89 = vld [vmem:[#allocation6 + $0x10] sm:$0xf]
    %v90 = vld [vmem:[#allocation6 + $0x14] sm:$0xf]
    %v91 = vld [vmem:[#allocation6 + $0x18] sm:$0xf]
    %v92 = vld [vmem:[#allocation6 + $0x1c] sm:$0xf]
    %v93 = vunpack.c.l.bf16 %v85
    %v94 = vunpack.c.l.bf16 %v86
    %v95 = vunpack.c.l.bf16 %v87
    %v96 = vunpack.c.l.bf16 %v88
    %v97 = vunpack.c.l.bf16 %v89
    %v98 = vunpack.c.l.bf16 %v90
    %v99 = vunpack.c.l.bf16 %v91
    %v100 = vunpack.c.l.bf16 %v92
    %101 = vst [vmem:[#allocation2] sm:$0xff] %v93
    %102 = vst [vmem:[#allocation2 + $0x8] sm:$0xff] %v94
    %103 = vst [vmem:[#allocation2 + $0x10] sm:$0xff] %v95
    %104 = vst [vmem:[#allocation2 + $0x18] sm:$0xff] %v96
    %105 = vst [vmem:[#allocation2 + $0x20] sm:$0xff] %v97
    %106 = vst [vmem:[#allocation2 + $0x28] sm:$0xff] %v98
    %107 = vst [vmem:[#allocation2 + $0x30] sm:$0xff] %v99
    %108 = vst [vmem:[#allocation2 + $0x38] sm:$0xff] %v100
    %v109 = vld [vmem:[#allocation2] sm:$0xff]
    %v110 = vld [vmem:[#allocation2 + $0x8] sm:$0xff]
    %v111 = vld [vmem:[#allocation2 + $0x10] sm:$0xff]
    %v112 = vld [vmem:[#allocation2 + $0x18] sm:$0xff]
    %v113 = vld [vmem:[#allocation2 + $0x20] sm:$0xff]
    %v114 = vld [vmem:[#allocation2 + $0x28] sm:$0xff]
    %v115 = vld [vmem:[#allocation2 + $0x30] sm:$0xff]
    %v116 = vld [vmem:[#allocation2 + $0x38] sm:$0xff]
    %v117 = vpack.c.bf16 %v110, %v109
    %v118 = vpack.c.bf16 %v112, %v111
    %v119 = vpack.c.bf16 %v114, %v113
    %v120 = vpack.c.bf16 %v116, %v115
    %v121 = vld [vmem:[#allocation8] sm:$0xf]
    %v122 = vld [vmem:[#allocation8 + $0x4] sm:$0xf]
    %v123 = vld [vmem:[#allocation8 + $0x8] sm:$0xf]
    %v124 = vld [vmem:[#allocation8 + $0xc] sm:$0xf]
    %v125 = vld [vmem:[#allocation8 + $0x10] sm:$0xf]
    %v126 = vld [vmem:[#allocation8 + $0x14] sm:$0xf]
    %v127 = vld [vmem:[#allocation8 + $0x18] sm:$0xf]
    %v128 = vld [vmem:[#allocation8 + $0x1c] sm:$0xf]
    %v129 = vld [vmem:[#allocation8 + $0x20] sm:$0xf]
    %v130 = vld [vmem:[#allocation8 + $0x24] sm:$0xf]
    %v131 = vld [vmem:[#allocation8 + $0x28] sm:$0xf]
    %v132 = vld [vmem:[#allocation8 + $0x2c] sm:$0xf]
    %v133 = vld [vmem:[#allocation8 + $0x30] sm:$0xf]
    %v134 = vld [vmem:[#allocation8 + $0x34] sm:$0xf]
    %v135 = vld [vmem:[#allocation8 + $0x38] sm:$0xf]
    %v136 = vld [vmem:[#allocation8 + $0x3c] sm:$0xf]
    %v153 = vunpack.c.l.b16 %v121
    %v154 = vunpack.c.l.b16 %v122
    %v155 = vunpack.c.l.b16 %v123
    %v156 = vunpack.c.l.b16 %v124
    %v157 = vunpack.c.l.b16 %v125
    %v158 = vunpack.c.l.b16 %v126
    %v159 = vunpack.c.l.b16 %v127
    %v160 = vunpack.c.l.b16 %v128
    %v161 = vunpack.c.l.b16 %v129
    %v162 = vunpack.c.l.b16 %v130
    %v163 = vunpack.c.l.b16 %v131
    %v164 = vunpack.c.l.b16 %v132
    %v165 = vunpack.c.l.b16 %v133
    %v166 = vunpack.c.l.b16 %v134
    %v167 = vunpack.c.l.b16 %v135
    %v168 = vunpack.c.l.b16 %v136
    %v169 = vpack.c.b16 %v154, %v153
    %v170 = vpack.c.b16 %v156, %v155
    %v171 = vpack.c.b16 %v158, %v157
    %v172 = vpack.c.b16 %v160, %v159
    %v173 = vpack.c.b16 %v162, %v161
    %v174 = vpack.c.b16 %v164, %v163
    %v175 = vpack.c.b16 %v166, %v165
    %v176 = vpack.c.b16 %v168, %v167
    %185 = vmatprep.subr.bf16.mxu0 0
    %186 = vmatpush1.bf16.msra.mxu0 %v169
    %187 = vmatprep.subr.bf16.mxu0 0
    %188 = vmatpush1.bf16.msra.mxu0 %v170
    %189 = vmatprep.subr.bf16.mxu0 0
    %190 = vmatpush1.bf16.msra.mxu0 %v171
    %191 = vmatprep.subr.bf16.mxu0 0
    %192 = vmatpush1.bf16.msra.mxu0 %v172
    %193 = vmatprep.subr.bf16.mxu0 0
    %194 = vmatpush1.bf16.msra.mxu0 %v173
    %195 = vmatprep.subr.bf16.mxu0 0
    %196 = vmatpush1.bf16.msra.mxu0 %v174
    %197 = vmatprep.subr.bf16.mxu0 0
    %198 = vmatpush1.bf16.msra.mxu0 %v175
    %199 = vmatprep.subr.bf16.mxu0 0
    %200 = vmatpush1.bf16.msra.mxu0 %v176
    %201 = vmatprep.subr.bf16.mxu0 0
    %202 = vmatpush1.bf16.msra.mxu0 0
    %203 = vmatprep.subr.bf16.mxu0 0
    %204 = vmatpush1.bf16.msra.mxu0 0
    %205 = vmatprep.subr.bf16.mxu0 0
    %206 = vmatpush1.bf16.msra.mxu0 0
    %207 = vmatprep.subr.bf16.mxu0 0
    %208 = vmatpush1.bf16.msra.mxu0 0
    %209 = vmatprep.subr.bf16.mxu0 0
    %210 = vmatpush1.bf16.msra.mxu0 0
    %211 = vmatprep.subr.bf16.mxu0 0
    %212 = vmatpush1.bf16.msra.mxu0 0
    %213 = vmatprep.subr.bf16.mxu0 0
    %214 = vmatpush1.bf16.msra.mxu0 0
    %215 = vmatprep.subr.bf16.mxu0 0
    %216 = vmatpush1.bf16.msra.mxu0 0
    %217 = vmatprep.mubr.bf16.mxu0 0
    %218 = vmatmul.mubr.bf16.gmra.mrb[0].mxu0 %v117
    %v219 = vpop.f32.mrb[0].mxu0
    %v220 = vadd.f32 0.0, %v219
    %v221 = vpop.f32.mrb[0].mxu0
    %v222 = vpop.f32.mrb[0].mxu0
    %v223 = vadd.f32 0.0, %v222
    %v224 = vpop.f32.mrb[0].mxu0
    %225 = vmatprep.mubr.bf16.mxu0 0
    %226 = vmatmul.mubr.bf16.gmra.mrb[0].mxu0 %v118
    %v227 = vpop.f32.mrb[0].mxu0
    %v228 = vadd.f32 0.0, %v227
    %v229 = vpop.f32.mrb[0].mxu0
    %v230 = vpop.f32.mrb[0].mxu0
    %v231 = vadd.f32 0.0, %v230
    %v232 = vpop.f32.mrb[0].mxu0
    %233 = vmatprep.mubr.bf16.mxu0 0
    %234 = vmatmul.mubr.bf16.gmra.mrb[0].mxu0 %v119
    %v235 = vpop.f32.mrb[0].mxu0
    %v236 = vadd.f32 0.0, %v235
    %v237 = vpop.f32.mrb[0].mxu0
    %v238 = vpop.f32.mrb[0].mxu0
    %v239 = vadd.f32 0.0, %v238
    %v240 = vpop.f32.mrb[0].mxu0
    %241 = vmatprep.mubr.bf16.mxu0 0
    %242 = vmatmul.mubr.bf16.gmra.mrb[0].mxu0 %v120
    %v243 = vpop.f32.mrb[0].mxu0
    %v244 = vadd.f32 0.0, %v243
    %v245 = vpop.f32.mrb[0].mxu0
    %v246 = vpop.f32.mrb[0].mxu0
    %v247 = vadd.f32 0.0, %v246
    %v248 = vpop.f32.mrb[0].mxu0
    %249 = vdwg.mxu0
    %v250 = vpack.c.bf16 %v223, %v220
    %v251 = vpack.c.bf16 %v231, %v228
    %v252 = vpack.c.bf16 %v239, %v236
    %v253 = vpack.c.bf16 %v247, %v244
    %v254 = vld [vmem:[#allocation9] sm:$0xf]
    %v255 = vld [vmem:[#allocation9 + $0x4] sm:$0xf]
    %v256 = vld [vmem:[#allocation9 + $0x8] sm:$0xf]
    %v257 = vld [vmem:[#allocation9 + $0xc] sm:$0xf]
    %v258 = vld [vmem:[#allocation9 + $0x10] sm:$0xf]
    %v259 = vld [vmem:[#allocation9 + $0x14] sm:$0xf]
    %v260 = vld [vmem:[#allocation9 + $0x18] sm:$0xf]
    %v261 = vld [vmem:[#allocation9 + $0x1c] sm:$0xf]
    %v262 = vld [vmem:[#allocation9 + $0x20] sm:$0xf]
    %v263 = vld [vmem:[#allocation9 + $0x24] sm:$0xf]
    %v264 = vld [vmem:[#allocation9 + $0x28] sm:$0xf]
    %v265 = vld [vmem:[#allocation9 + $0x2c] sm:$0xf]
    %v266 = vld [vmem:[#allocation9 + $0x30] sm:$0xf]
    %v267 = vld [vmem:[#allocation9 + $0x34] sm:$0xf]
    %v268 = vld [vmem:[#allocation9 + $0x38] sm:$0xf]
    %v269 = vld [vmem:[#allocation9 + $0x3c] sm:$0xf]
    %v286 = vunpack.c.l.b16 %v254
    %v287 = vunpack.c.l.b16 %v255
    %v288 = vunpack.c.l.b16 %v256
    %v289 = vunpack.c.l.b16 %v257
    %v290 = vunpack.c.l.b16 %v258
    %v291 = vunpack.c.l.b16 %v259
    %v292 = vunpack.c.l.b16 %v260
    %v293 = vunpack.c.l.b16 %v261
    %v294 = vunpack.c.l.b16 %v262
    %v295 = vunpack.c.l.b16 %v263
    %v296 = vunpack.c.l.b16 %v264
    %v297 = vunpack.c.l.b16 %v265
    %v298 = vunpack.c.l.b16 %v266
    %v299 = vunpack.c.l.b16 %v267
    %v300 = vunpack.c.l.b16 %v268
    %v301 = vunpack.c.l.b16 %v269
    %v302 = vpack.c.b16 %v287, %v286
    %v303 = vpack.c.b16 %v289, %v288
    %v304 = vpack.c.b16 %v291, %v290
    %v305 = vpack.c.b16 %v293, %v292
    %v306 = vpack.c.b16 %v295, %v294
    %v307 = vpack.c.b16 %v297, %v296
    %v308 = vpack.c.b16 %v299, %v298
    %v309 = vpack.c.b16 %v301, %v300
    %318 = vmatprep.subr.bf16.mxu0 0
    %319 = vmatpush1.bf16.msra.mxu0 %v302
    %320 = vmatprep.subr.bf16.mxu0 0
    %321 = vmatpush1.bf16.msra.mxu0 %v303
    %322 = vmatprep.subr.bf16.mxu0 0
    %323 = vmatpush1.bf16.msra.mxu0 %v304
    %324 = vmatprep.subr.bf16.mxu0 0
    %325 = vmatpush1.bf16.msra.mxu0 %v305
    %326 = vmatprep.subr.bf16.mxu0 0
    %327 = vmatpush1.bf16.msra.mxu0 %v306
    %328 = vmatprep.subr.bf16.mxu0 0
    %329 = vmatpush1.bf16.msra.mxu0 %v307
    %330 = vmatprep.subr.bf16.mxu0 0
    %331 = vmatpush1.bf16.msra.mxu0 %v308
    %332 = vmatprep.subr.bf16.mxu0 0
    %333 = vmatpush1.bf16.msra.mxu0 %v309
    %334 = vmatprep.subr.bf16.mxu0 0
    %335 = vmatpush1.bf16.msra.mxu0 0
    %336 = vmatprep.subr.bf16.mxu0 0
    %337 = vmatpush1.bf16.msra.mxu0 0
    %338 = vmatprep.subr.bf16.mxu0 0
    %339 = vmatpush1.bf16.msra.mxu0 0
    %340 = vmatprep.subr.bf16.mxu0 0
    %341 = vmatpush1.bf16.msra.mxu0 0
    %342 = vmatprep.subr.bf16.mxu0 0
    %343 = vmatpush1.bf16.msra.mxu0 0
    %344 = vmatprep.subr.bf16.mxu0 0
    %345 = vmatpush1.bf16.msra.mxu0 0
    %346 = vmatprep.subr.bf16.mxu0 0
    %347 = vmatpush1.bf16.msra.mxu0 0
    %348 = vmatprep.subr.bf16.mxu0 0
    %349 = vmatpush1.bf16.msra.mxu0 0
    %350 = vmatprep.mubr.bf16.mxu0 0
    %351 = vmatmul.mubr.bf16.gmra.mrb[0].mxu0 %v117
    %v352 = vpop.f32.mrb[0].mxu0
    %v353 = vadd.f32 0.0, %v352
    %v354 = vpop.f32.mrb[0].mxu0
    %v355 = vpop.f32.mrb[0].mxu0
    %v356 = vadd.f32 0.0, %v355
    %v357 = vpop.f32.mrb[0].mxu0
    %358 = vmatprep.mubr.bf16.mxu0 0
    %359 = vmatmul.mubr.bf16.gmra.mrb[0].mxu0 %v118
    %v360 = vpop.f32.mrb[0].mxu0
    %v361 = vadd.f32 0.0, %v360
    %v362 = vpop.f32.mrb[0].mxu0
    %v363 = vpop.f32.mrb[0].mxu0
    %v364 = vadd.f32 0.0, %v363
    %v365 = vpop.f32.mrb[0].mxu0
    %366 = vmatprep.mubr.bf16.mxu0 0
    %367 = vmatmul.mubr.bf16.gmra.mrb[0].mxu0 %v119
    %v368 = vpop.f32.mrb[0].mxu0
    %v369 = vadd.f32 0.0, %v368
    %v370 = vpop.f32.mrb[0].mxu0
    %v371 = vpop.f32.mrb[0].mxu0
    %v372 = vadd.f32 0.0, %v371
    %v373 = vpop.f32.mrb[0].mxu0
    %374 = vmatprep.mubr.bf16.mxu0 0
    %375 = vmatmul.mubr.bf16.gmra.mrb[0].mxu0 %v120
    %v376 = vpop.f32.mrb[0].mxu0
    %v377 = vadd.f32 0.0, %v376
    %v378 = vpop.f32.mrb[0].mxu0
    %v379 = vpop.f32.mrb[0].mxu0
    %v380 = vadd.f32 0.0, %v379
    %v381 = vpop.f32.mrb[0].mxu0
    %382 = vdwg.mxu0
    %v391 = vunpack.c.l.b16 %v77
    %v392 = vunpack.c.l.b16 %v78
    %v393 = vunpack.c.l.b16 %v79
    %v394 = vunpack.c.l.b16 %v80
    %v395 = vunpack.c.l.b16 %v81
    %v396 = vunpack.c.l.b16 %v82
    %v397 = vunpack.c.l.b16 %v83
    %v398 = vunpack.c.l.b16 %v84
    %v399 = vpack.c.b16 %v392, %v391
    %v400 = vpack.c.b16 %v394, %v393
    %v401 = vpack.c.b16 %v396, %v395
    %v402 = vpack.c.b16 %v398, %v397
    %vm403 = vcmask 523264
    %v405 = vsel %vm403, %v399, 0
    %v408 = vsel %vm403, %v400, 0
    %v411 = vsel %vm403, %v401, 0
    %v414 = vsel %vm403, %v402, 0
    %416 = vmatprep.subr.bf16.mxu0 0
    %417 = vmatpush1.bf16.msra.mxu0 %v250
    %418 = vmatprep.subr.bf16.mxu0 0
    %419 = vmatpush1.bf16.msra.mxu0 %v251
    %420 = vmatprep.subr.bf16.mxu0 0
    %421 = vmatpush1.bf16.msra.mxu0 %v252
    %422 = vmatprep.subr.bf16.mxu0 0
    %423 = vmatpush1.bf16.msra.mxu0 %v253
    %424 = vmatprep.subr.bf16.mxu0 0
    %425 = vmatpush1.bf16.msra.mxu0 0
    %426 = vmatprep.subr.bf16.mxu0 0
    %427 = vmatpush1.bf16.msra.mxu0 0
    %428 = vmatprep.subr.bf16.mxu0 0
    %429 = vmatpush1.bf16.msra.mxu0 0
    %430 = vmatprep.subr.bf16.mxu0 0
    %431 = vmatpush1.bf16.msra.mxu0 0
    %432 = vmatprep.subr.bf16.mxu0 0
    %433 = vmatpush1.bf16.msra.mxu0 0
    %434 = vmatprep.subr.bf16.mxu0 0
    %435 = vmatpush1.bf16.msra.mxu0 0
    %436 = vmatprep.subr.bf16.mxu0 0
    %437 = vmatpush1.bf16.msra.mxu0 0
    %438 = vmatprep.subr.bf16.mxu0 0
    %439 = vmatpush1.bf16.msra.mxu0 0
    %440 = vmatprep.subr.bf16.mxu0 0
    %441 = vmatpush1.bf16.msra.mxu0 0
    %442 = vmatprep.subr.bf16.mxu0 0
    %443 = vmatpush1.bf16.msra.mxu0 0
    %444 = vmatprep.subr.bf16.mxu0 0
    %445 = vmatpush1.bf16.msra.mxu0 0
    %446 = vmatprep.subr.bf16.mxu0 0
    %447 = vmatpush1.bf16.msra.mxu0 0
    %448 = vmatprep.mubr.bf16.mxu0 0
    %449 = vmatmul.mubr.bf16.gmra.mrb[0].mxu0 %v405
    %v450 = vpop.f32.mrb[0].mxu0
    %v451 = vadd.f32 %v353, %v450
    %v452 = vpop.f32.mrb[0].mxu0
    %v453 = vpop.f32.mrb[0].mxu0
    %v454 = vadd.f32 %v356, %v453
    %v455 = vpop.f32.mrb[0].mxu0
    %456 = vmatprep.mubr.bf16.mxu0 0
    %457 = vmatmul.mubr.bf16.gmra.mrb[0].mxu0 %v408
    %v458 = vpop.f32.mrb[0].mxu0
    %v459 = vadd.f32 %v361, %v458
    %v460 = vpop.f32.mrb[0].mxu0
    %v461 = vpop.f32.mrb[0].mxu0
    %v462 = vadd.f32 %v364, %v461
    %v463 = vpop.f32.mrb[0].mxu0
    %464 = vmatprep.mubr.bf16.mxu0 0
    %465 = vmatmul.mubr.bf16.gmra.mrb[0].mxu0 %v411
    %v466 = vpop.f32.mrb[0].mxu0
    %v467 = vadd.f32 %v369, %v466
    %v468 = vpop.f32.mrb[0].mxu0
    %v469 = vpop.f32.mrb[0].mxu0
    %v470 = vadd.f32 %v372, %v469
    %v471 = vpop.f32.mrb[0].mxu0
    %472 = vmatprep.mubr.bf16.mxu0 0
    %473 = vmatmul.mubr.bf16.gmra.mrb[0].mxu0 %v414
    %v474 = vpop.f32.mrb[0].mxu0
    %v475 = vadd.f32 %v377, %v474
    %v476 = vpop.f32.mrb[0].mxu0
    %v477 = vpop.f32.mrb[0].mxu0
    %v478 = vadd.f32 %v380, %v477
    %v479 = vpop.f32.mrb[0].mxu0
    %480 = vdwg.mxu0
    %v481 = vld [vmem:[%s4] sm:$0x1]
    %v483 = vlaneseq
    %v484 = vshrl.u32 %v483, 7
    %v485 = vsub.s32 0, %v484
    %v486 = vrot.slane %v481, %v485
    %v488 = vadd.f32 %v451, %v486
    %v489 = vadd.f32 %v454, %v486
    %v490 = vadd.f32 %v459, %v486
    %v491 = vadd.f32 %v462, %v486
    %v492 = vadd.f32 %v467, %v486
    %v493 = vadd.f32 %v470, %v486
    %v494 = vadd.f32 %v475, %v486
    %v495 = vadd.f32 %v478, %v486
    %v496 = vmax.f32 %v488, 0.0
    %v497 = vmax.f32 %v489, 0.0
    %v498 = vmax.f32 %v490, 0.0
    %v499 = vmax.f32 %v491, 0.0
    %v500 = vmax.f32 %v492, 0.0
    %v501 = vmax.f32 %v493, 0.0
    %v502 = vmax.f32 %v494, 0.0
    %v503 = vmax.f32 %v495, 0.0
    %504 = vst [vmem:[#allocation2] sm:$0xff] %v496
    %505 = vst [vmem:[#allocation2 + $0x8] sm:$0xff] %v497
    %506 = vst [vmem:[#allocation2 + $0x10] sm:$0xff] %v498
    %507 = vst [vmem:[#allocation2 + $0x18] sm:$0xff] %v499
    %508 = vst [vmem:[#allocation2 + $0x20] sm:$0xff] %v500
    %509 = vst [vmem:[#allocation2 + $0x28] sm:$0xff] %v501
    %510 = vst [vmem:[#allocation2 + $0x30] sm:$0xff] %v502
    %511 = vst [vmem:[#allocation2 + $0x38] sm:$0xff] %v503
    %v512 = vld [vmem:[#allocation2] sm:$0xff]
    %v513 = vld [vmem:[#allocation2 + $0x8] sm:$0xff]
    %v514 = vld [vmem:[#allocation2 + $0x10] sm:$0xff]
    %v515 = vld [vmem:[#allocation2 + $0x18] sm:$0xff]
    %v516 = vld [vmem:[#allocation2 + $0x20] sm:$0xff]
    %v517 = vld [vmem:[#allocation2 + $0x28] sm:$0xff]
    %v518 = vld [vmem:[#allocation2 + $0x30] sm:$0xff]
    %v519 = vld [vmem:[#allocation2 + $0x38] sm:$0xff]
    %v520 = vpack.c.bf16 %v513, %v512
    %v521 = vpack.c.bf16 %v515, %v514
    %v522 = vpack.c.bf16 %v517, %v516
    %v523 = vpack.c.bf16 %v519, %v518
    %s524 = scalar_lea.vmem [#allocation8], 64
    %v525 = vld [vmem:[%s524] sm:$0xf]
    %v526 = vld [vmem:[%s524 + $0x4] sm:$0xf]
    %v527 = vld [vmem:[%s524 + $0x8] sm:$0xf]
    %v528 = vld [vmem:[%s524 + $0xc] sm:$0xf]
    %v529 = vld [vmem:[%s524 + $0x10] sm:$0xf]
    %v530 = vld [vmem:[%s524 + $0x14] sm:$0xf]
    %v531 = vld [vmem:[%s524 + $0x18] sm:$0xf]
    %v532 = vld [vmem:[%s524 + $0x1c] sm:$0xf]
    %v533 = vld [vmem:[%s524 + $0x20] sm:$0xf]
    %v534 = vld [vmem:[%s524 + $0x24] sm:$0xf]
    %v535 = vld [vmem:[%s524 + $0x28] sm:$0xf]
    %v536 = vld [vmem:[%s524 + $0x2c] sm:$0xf]
    %v537 = vld [vmem:[%s524 + $0x30] sm:$0xf]
    %v538 = vld [vmem:[%s524 + $0x34] sm:$0xf]
    %v539 = vld [vmem:[%s524 + $0x38] sm:$0xf]
    %v540 = vld [vmem:[%s524 + $0x3c] sm:$0xf]
    %v557 = vunpack.c.l.b16 %v525
    %v558 = vunpack.c.l.b16 %v526
    %v559 = vunpack.c.l.b16 %v527
    %v560 = vunpack.c.l.b16 %v528
    %v561 = vunpack.c.l.b16 %v529
    %v562 = vunpack.c.l.b16 %v530
    %v563 = vunpack.c.l.b16 %v531
    %v564 = vunpack.c.l.b16 %v532
    %v565 = vunpack.c.l.b16 %v533
    %v566 = vunpack.c.l.b16 %v534
    %v567 = vunpack.c.l.b16 %v535
    %v568 = vunpack.c.l.b16 %v536
    %v569 = vunpack.c.l.b16 %v537
    %v570 = vunpack.c.l.b16 %v538
    %v571 = vunpack.c.l.b16 %v539
    %v572 = vunpack.c.l.b16 %v540
    %v573 = vpack.c.b16 %v558, %v557
    %v574 = vpack.c.b16 %v560, %v559
    %v575 = vpack.c.b16 %v562, %v561
    %v576 = vpack.c.b16 %v564, %v563
    %v577 = vpack.c.b16 %v566, %v565
    %v578 = vpack.c.b16 %v568, %v567
    %v579 = vpack.c.b16 %v570, %v569
    %v580 = vpack.c.b16 %v572, %v571
    %589 = vmatprep.subr.bf16.mxu0 0
    %590 = vmatpush1.bf16.msra.mxu0 %v573
    %591 = vmatprep.subr.bf16.mxu0 0
    %592 = vmatpush1.bf16.msra.mxu0 %v574
    %593 = vmatprep.subr.bf16.mxu0 0
    %594 = vmatpush1.bf16.msra.mxu0 %v575
    %595 = vmatprep.subr.bf16.mxu0 0
    %596 = vmatpush1.bf16.msra.mxu0 %v576
    %597 = vmatprep.subr.bf16.mxu0 0
    %598 = vmatpush1.bf16.msra.mxu0 %v577
    %599 = vmatprep.subr.bf16.mxu0 0
    %600 = vmatpush1.bf16.msra.mxu0 %v578
    %601 = vmatprep.subr.bf16.mxu0 0
    %602 = vmatpush1.bf16.msra.mxu0 %v579
    %603 = vmatprep.subr.bf16.mxu0 0
    %604 = vmatpush1.bf16.msra.mxu0 %v580
    %605 = vmatprep.subr.bf16.mxu0 0
    %606 = vmatpush1.bf16.msra.mxu0 0
    %607 = vmatprep.subr.bf16.mxu0 0
    %608 = vmatpush1.bf16.msra.mxu0 0
    %609 = vmatprep.subr.bf16.mxu0 0
    %610 = vmatpush1.bf16.msra.mxu0 0
    %611 = vmatprep.subr.bf16.mxu0 0
    %612 = vmatpush1.bf16.msra.mxu0 0
    %613 = vmatprep.subr.bf16.mxu0 0
    %614 = vmatpush1.bf16.msra.mxu0 0
    %615 = vmatprep.subr.bf16.mxu0 0
    %616 = vmatpush1.bf16.msra.mxu0 0
    %617 = vmatprep.subr.bf16.mxu0 0
    %618 = vmatpush1.bf16.msra.mxu0 0
    %619 = vmatprep.subr.bf16.mxu0 0
    %620 = vmatpush1.bf16.msra.mxu0 0
    %621 = vmatprep.mubr.bf16.mxu0 0
    %622 = vmatmul.mubr.bf16.gmra.mrb[0].mxu0 %v520
    %v623 = vpop.f32.mrb[0].mxu0
    %v624 = vadd.f32 0.0, %v623
    %v625 = vpop.f32.mrb[0].mxu0
    %v626 = vpop.f32.mrb[0].mxu0
    %v627 = vadd.f32 0.0, %v626
    %v628 = vpop.f32.mrb[0].mxu0
    %629 = vmatprep.mubr.bf16.mxu0 0
    %630 = vmatmul.mubr.bf16.gmra.mrb[0].mxu0 %v521
    %v631 = vpop.f32.mrb[0].mxu0
    %v632 = vadd.f32 0.0, %v631
    %v633 = vpop.f32.mrb[0].mxu0
    %v634 = vpop.f32.mrb[0].mxu0
    %v635 = vadd.f32 0.0, %v634
    %v636 = vpop.f32.mrb[0].mxu0
    %637 = vmatprep.mubr.bf16.mxu0 0
    %638 = vmatmul.mubr.bf16.gmra.mrb[0].mxu0 %v522
    %v639 = vpop.f32.mrb[0].mxu0
    %v640 = vadd.f32 0.0, %v639
    %v641 = vpop.f32.mrb[0].mxu0
    %v642 = vpop.f32.mrb[0].mxu0
    %v643 = vadd.f32 0.0, %v642
    %v644 = vpop.f32.mrb[0].mxu0
    %645 = vmatprep.mubr.bf16.mxu0 0
    %646 = vmatmul.mubr.bf16.gmra.mrb[0].mxu0 %v523
    %v647 = vpop.f32.mrb[0].mxu0
    %v648 = vadd.f32 0.0, %v647
    %v649 = vpop.f32.mrb[0].mxu0
    %v650 = vpop.f32.mrb[0].mxu0
    %v651 = vadd.f32 0.0, %v650
    %v652 = vpop.f32.mrb[0].mxu0
    %653 = vdwg.mxu0
    %v654 = vpack.c.bf16 %v627, %v624
    %v655 = vpack.c.bf16 %v635, %v632
    %v656 = vpack.c.bf16 %v643, %v640
    %v657 = vpack.c.bf16 %v651, %v648
    %s658 = scalar_lea.vmem [#allocation9], 64
    %v659 = vld [vmem:[%s658] sm:$0xf]
    %v660 = vld [vmem:[%s658 + $0x4] sm:$0xf]
    %v661 = vld [vmem:[%s658 + $0x8] sm:$0xf]
    %v662 = vld [vmem:[%s658 + $0xc] sm:$0xf]
    %v663 = vld [vmem:[%s658 + $0x10] sm:$0xf]
    %v664 = vld [vmem:[%s658 + $0x14] sm:$0xf]
    %v665 = vld [vmem:[%s658 + $0x18] sm:$0xf]
    %v666 = vld [vmem:[%s658 + $0x1c] sm:$0xf]
    %v667 = vld [vmem:[%s658 + $0x20] sm:$0xf]
    %v668 = vld [vmem:[%s658 + $0x24] sm:$0xf]
    %v669 = vld [vmem:[%s658 + $0x28] sm:$0xf]
    %v670 = vld [vmem:[%s658 + $0x2c] sm:$0xf]
    %v671 = vld [vmem:[%s658 + $0x30] sm:$0xf]
    %v672 = vld [vmem:[%s658 + $0x34] sm:$0xf]
    %v673 = vld [vmem:[%s658 + $0x38] sm:$0xf]
    %v674 = vld [vmem:[%s658 + $0x3c] sm:$0xf]
    %v691 = vunpack.c.l.b16 %v659
    %v692 = vunpack.c.l.b16 %v660
    %v693 = vunpack.c.l.b16 %v661
    %v694 = vunpack.c.l.b16 %v662
    %v695 = vunpack.c.l.b16 %v663
    %v696 = vunpack.c.l.b16 %v664
    %v697 = vunpack.c.l.b16 %v665
    %v698 = vunpack.c.l.b16 %v666
    %v699 = vunpack.c.l.b16 %v667
    %v700 = vunpack.c.l.b16 %v668
    %v701 = vunpack.c.l.b16 %v669
    %v702 = vunpack.c.l.b16 %v670
    %v703 = vunpack.c.l.b16 %v671
    %v704 = vunpack.c.l.b16 %v672
    %v705 = vunpack.c.l.b16 %v673
    %v706 = vunpack.c.l.b16 %v674
    %v707 = vpack.c.b16 %v692, %v691
    %v708 = vpack.c.b16 %v694, %v693
    %v709 = vpack.c.b16 %v696, %v695
    %v710 = vpack.c.b16 %v698, %v697
    %v711 = vpack.c.b16 %v700, %v699
    %v712 = vpack.c.b16 %v702, %v701
    %v713 = vpack.c.b16 %v704, %v703
    %v714 = vpack.c.b16 %v706, %v705
    %723 = vmatprep.subr.bf16.mxu0 0
    %724 = vmatpush1.bf16.msra.mxu0 %v707
    %725 = vmatprep.subr.bf16.mxu0 0
    %726 = vmatpush1.bf16.msra.mxu0 %v708
    %727 = vmatprep.subr.bf16.mxu0 0
    %728 = vmatpush1.bf16.msra.mxu0 %v709
    %729 = vmatprep.subr.bf16.mxu0 0
    %730 = vmatpush1.bf16.msra.mxu0 %v710
    %731 = vmatprep.subr.bf16.mxu0 0
    %732 = vmatpush1.bf16.msra.mxu0 %v711
    %733 = vmatprep.subr.bf16.mxu0 0
    %734 = vmatpush1.bf16.msra.mxu0 %v712
    %735 = vmatprep.subr.bf16.mxu0 0
    %736 = vmatpush1.bf16.msra.mxu0 %v713
    %737 = vmatprep.subr.bf16.mxu0 0
    %738 = vmatpush1.bf16.msra.mxu0 %v714
    %739 = vmatprep.subr.bf16.mxu0 0
    %740 = vmatpush1.bf16.msra.mxu0 0
    %741 = vmatprep.subr.bf16.mxu0 0
    %742 = vmatpush1.bf16.msra.mxu0 0
    %743 = vmatprep.subr.bf16.mxu0 0
    %744 = vmatpush1.bf16.msra.mxu0 0
    %745 = vmatprep.subr.bf16.mxu0 0
    %746 = vmatpush1.bf16.msra.mxu0 0
    %747 = vmatprep.subr.bf16.mxu0 0
    %748 = vmatpush1.bf16.msra.mxu0 0
    %749 = vmatprep.subr.bf16.mxu0 0
    %750 = vmatpush1.bf16.msra.mxu0 0
    %751 = vmatprep.subr.bf16.mxu0 0
    %752 = vmatpush1.bf16.msra.mxu0 0
    %753 = vmatprep.subr.bf16.mxu0 0
    %754 = vmatpush1.bf16.msra.mxu0 0
    %755 = vmatprep.mubr.bf16.mxu0 0
    %756 = vmatmul.mubr.bf16.gmra.mrb[0].mxu0 %v520
    %v757 = vpop.f32.mrb[0].mxu0
    %v758 = vadd.f32 0.0, %v757
    %v759 = vpop.f32.mrb[0].mxu0
    %v760 = vpop.f32.mrb[0].mxu0
    %v761 = vadd.f32 0.0, %v760
    %v762 = vpop.f32.mrb[0].mxu0
    %763 = vmatprep.mubr.bf16.mxu0 0
    %764 = vmatmul.mubr.bf16.gmra.mrb[0].mxu0 %v521
    %v765 = vpop.f32.mrb[0].mxu0
    %v766 = vadd.f32 0.0, %v765
    %v767 = vpop.f32.mrb[0].mxu0
    %v768 = vpop.f32.mrb[0].mxu0
    %v769 = vadd.f32 0.0, %v768
    %v770 = vpop.f32.mrb[0].mxu0
    %771 = vmatprep.mubr.bf16.mxu0 0
    %772 = vmatmul.mubr.bf16.gmra.mrb[0].mxu0 %v522
    %v773 = vpop.f32.mrb[0].mxu0
    %v774 = vadd.f32 0.0, %v773
    %v775 = vpop.f32.mrb[0].mxu0
    %v776 = vpop.f32.mrb[0].mxu0
    %v777 = vadd.f32 0.0, %v776
    %v778 = vpop.f32.mrb[0].mxu0
    %779 = vmatprep.mubr.bf16.mxu0 0
    %780 = vmatmul.mubr.bf16.gmra.mrb[0].mxu0 %v523
    %v781 = vpop.f32.mrb[0].mxu0
    %v782 = vadd.f32 0.0, %v781
    %v783 = vpop.f32.mrb[0].mxu0
    %v784 = vpop.f32.mrb[0].mxu0
    %v785 = vadd.f32 0.0, %v784
    %v786 = vpop.f32.mrb[0].mxu0
    %787 = vdwg.mxu0
    %788 = vmatprep.subr.bf16.mxu0 0
    %789 = vmatpush1.bf16.msra.mxu0 %v654
    %790 = vmatprep.subr.bf16.mxu0 0
    %791 = vmatpush1.bf16.msra.mxu0 %v655
    %792 = vmatprep.subr.bf16.mxu0 0
    %793 = vmatpush1.bf16.msra.mxu0 %v656
    %794 = vmatprep.subr.bf16.mxu0 0
    %795 = vmatpush1.bf16.msra.mxu0 %v657
    %796 = vmatprep.subr.bf16.mxu0 0
    %797 = vmatpush1.bf16.msra.mxu0 0
    %798 = vmatprep.subr.bf16.mxu0 0
    %799 = vmatpush1.bf16.msra.mxu0 0
    %800 = vmatprep.subr.bf16.mxu0 0
    %801 = vmatpush1.bf16.msra.mxu0 0
    %802 = vmatprep.subr.bf16.mxu0 0
    %803 = vmatpush1.bf16.msra.mxu0 0
    %804 = vmatprep.subr.bf16.mxu0 0
    %805 = vmatpush1.bf16.msra.mxu0 0
    %806 = vmatprep.subr.bf16.mxu0 0
    %807 = vmatpush1.bf16.msra.mxu0 0
    %808 = vmatprep.subr.bf16.mxu0 0
    %809 = vmatpush1.bf16.msra.mxu0 0
    %810 = vmatprep.subr.bf16.mxu0 0
    %811 = vmatpush1.bf16.msra.mxu0 0
    %812 = vmatprep.subr.bf16.mxu0 0
    %813 = vmatpush1.bf16.msra.mxu0 0
    %814 = vmatprep.subr.bf16.mxu0 0
    %815 = vmatpush1.bf16.msra.mxu0 0
    %816 = vmatprep.subr.bf16.mxu0 0
    %817 = vmatpush1.bf16.msra.mxu0 0
    %818 = vmatprep.subr.bf16.mxu0 0
    %819 = vmatpush1.bf16.msra.mxu0 0
    %820 = vmatprep.mubr.bf16.mxu0 0
    %821 = vmatmul.mubr.bf16.gmra.mrb[0].mxu0 %v405
    %v822 = vpop.f32.mrb[0].mxu0
    %v823 = vadd.f32 %v758, %v822
    %v824 = vpop.f32.mrb[0].mxu0
    %v825 = vpop.f32.mrb[0].mxu0
    %v826 = vadd.f32 %v761, %v825
    %v827 = vpop.f32.mrb[0].mxu0
    %828 = vmatprep.mubr.bf16.mxu0 0
    %829 = vmatmul.mubr.bf16.gmra.mrb[0].mxu0 %v408
    %v830 = vpop.f32.mrb[0].mxu0
    %v831 = vadd.f32 %v766, %v830
    %v832 = vpop.f32.mrb[0].mxu0
    %v833 = vpop.f32.mrb[0].mxu0
    %v834 = vadd.f32 %v769, %v833
    %v835 = vpop.f32.mrb[0].mxu0
    %836 = vmatprep.mubr.bf16.mxu0 0
    %837 = vmatmul.mubr.bf16.gmra.mrb[0].mxu0 %v411
    %v838 = vpop.f32.mrb[0].mxu0
    %v839 = vadd.f32 %v774, %v838
    %v840 = vpop.f32.mrb[0].mxu0
    %v841 = vpop.f32.mrb[0].mxu0
    %v842 = vadd.f32 %v777, %v841
    %v843 = vpop.f32.mrb[0].mxu0
    %844 = vmatprep.mubr.bf16.mxu0 0
    %845 = vmatmul.mubr.bf16.gmra.mrb[0].mxu0 %v414
    %v846 = vpop.f32.mrb[0].mxu0
    %v847 = vadd.f32 %v782, %v846
    %v848 = vpop.f32.mrb[0].mxu0
    %v849 = vpop.f32.mrb[0].mxu0
    %v850 = vadd.f32 %v785, %v849
    %v851 = vpop.f32.mrb[0].mxu0
    %852 = vdwg.mxu0
    %s853 = scalar_lea.vmem %s4, 1
    %v854 = vld [vmem:[%s853] sm:$0x1]
    %v856 = vlaneseq
    %v857 = vshrl.u32 %v856, 7
    %v858 = vsub.s32 0, %v857
    %v859 = vrot.slane %v854, %v858
    %v861 = vadd.f32 %v823, %v859
    %v862 = vadd.f32 %v826, %v859
    %v863 = vadd.f32 %v831, %v859
    %v864 = vadd.f32 %v834, %v859
    %v865 = vadd.f32 %v839, %v859
    %v866 = vadd.f32 %v842, %v859
    %v867 = vadd.f32 %v847, %v859
    %v868 = vadd.f32 %v850, %v859
    %v869 = vmax.f32 %v861, 0.0
    %v870 = vmax.f32 %v862, 0.0
    %v871 = vmax.f32 %v863, 0.0
    %v872 = vmax.f32 %v864, 0.0
    %v873 = vmax.f32 %v865, 0.0
    %v874 = vmax.f32 %v866, 0.0
    %v875 = vmax.f32 %v867, 0.0
    %v876 = vmax.f32 %v868, 0.0
    %877 = vst [vmem:[#allocation2] sm:$0xff] %v869
    %878 = vst [vmem:[#allocation2 + $0x8] sm:$0xff] %v870
    %879 = vst [vmem:[#allocation2 + $0x10] sm:$0xff] %v871
    %880 = vst [vmem:[#allocation2 + $0x18] sm:$0xff] %v872
    %881 = vst [vmem:[#allocation2 + $0x20] sm:$0xff] %v873
    %882 = vst [vmem:[#allocation2 + $0x28] sm:$0xff] %v874
    %883 = vst [vmem:[#allocation2 + $0x30] sm:$0xff] %v875
    %884 = vst [vmem:[#allocation2 + $0x38] sm:$0xff] %v876
    %v885 = vld [vmem:[#allocation2] sm:$0xff]
    %v886 = vld [vmem:[#allocation2 + $0x8] sm:$0xff]
    %v887 = vld [vmem:[#allocation2 + $0x10] sm:$0xff]
    %v888 = vld [vmem:[#allocation2 + $0x18] sm:$0xff]
    %v889 = vld [vmem:[#allocation2 + $0x20] sm:$0xff]
    %v890 = vld [vmem:[#allocation2 + $0x28] sm:$0xff]
    %v891 = vld [vmem:[#allocation2 + $0x30] sm:$0xff]
    %v892 = vld [vmem:[#allocation2 + $0x38] sm:$0xff]
    %v893 = vpack.c.bf16 %v886, %v885
    %v894 = vpack.c.bf16 %v888, %v887
    %v895 = vpack.c.bf16 %v890, %v889
    %v896 = vpack.c.bf16 %v892, %v891
    %s897 = scalar_lea.vmem [#allocation8], 128
    %v898 = vld [vmem:[%s897] sm:$0xf]
    %v899 = vld [vmem:[%s897 + $0x4] sm:$0xf]
    %v900 = vld [vmem:[%s897 + $0x8] sm:$0xf]
    %v901 = vld [vmem:[%s897 + $0xc] sm:$0xf]
    %v902 = vld [vmem:[%s897 + $0x10] sm:$0xf]
    %v903 = vld [vmem:[%s897 + $0x14] sm:$0xf]
    %v904 = vld [vmem:[%s897 + $0x18] sm:$0xf]
    %v905 = vld [vmem:[%s897 + $0x1c] sm:$0xf]
    %v906 = vld [vmem:[%s897 + $0x20] sm:$0xf]
    %v907 = vld [vmem:[%s897 + $0x24] sm:$0xf]
    %v908 = vld [vmem:[%s897 + $0x28] sm:$0xf]
    %v909 = vld [vmem:[%s897 + $0x2c] sm:$0xf]
    %v910 = vld [vmem:[%s897 + $0x30] sm:$0xf]
    %v911 = vld [vmem:[%s897 + $0x34] sm:$0xf]
    %v912 = vld [vmem:[%s897 + $0x38] sm:$0xf]
    %v913 = vld [vmem:[%s897 + $0x3c] sm:$0xf]
    %v930 = vunpack.c.l.b16 %v898
    %v931 = vunpack.c.l.b16 %v899
    %v932 = vunpack.c.l.b16 %v900
    %v933 = vunpack.c.l.b16 %v901
    %v934 = vunpack.c.l.b16 %v902
    %v935 = vunpack.c.l.b16 %v903
    %v936 = vunpack.c.l.b16 %v904
    %v937 = vunpack.c.l.b16 %v905
    %v938 = vunpack.c.l.b16 %v906
    %v939 = vunpack.c.l.b16 %v907
    %v940 = vunpack.c.l.b16 %v908
    %v941 = vunpack.c.l.b16 %v909
    %v942 = vunpack.c.l.b16 %v910
    %v943 = vunpack.c.l.b16 %v911
    %v944 = vunpack.c.l.b16 %v912
    %v945 = vunpack.c.l.b16 %v913
    %v946 = vpack.c.b16 %v931, %v930
    %v947 = vpack.c.b16 %v933, %v932
    %v948 = vpack.c.b16 %v935, %v934
    %v949 = vpack.c.b16 %v937, %v936
    %v950 = vpack.c.b16 %v939, %v938
    %v951 = vpack.c.b16 %v941, %v940
    %v952 = vpack.c.b16 %v943, %v942
    %v953 = vpack.c.b16 %v945, %v944
    %962 = vmatprep.subr.bf16.mxu0 0
    %963 = vmatpush1.bf16.msra.mxu0 %v946
    %964 = vmatprep.subr.bf16.mxu0 0
    %965 = vmatpush1.bf16.msra.mxu0 %v947
    %966 = vmatprep.subr.bf16.mxu0 0
    %967 = vmatpush1.bf16.msra.mxu0 %v948
    %968 = vmatprep.subr.bf16.mxu0 0
    %969 = vmatpush1.bf16.msra.mxu0 %v949
    %970 = vmatprep.subr.bf16.mxu0 0
    %971 = vmatpush1.bf16.msra.mxu0 %v950
    %972 = vmatprep.subr.bf16.mxu0 0
    %973 = vmatpush1.bf16.msra.mxu0 %v951
    %974 = vmatprep.subr.bf16.mxu0 0
    %975 = vmatpush1.bf16.msra.mxu0 %v952
    %976 = vmatprep.subr.bf16.mxu0 0
    %977 = vmatpush1.bf16.msra.mxu0 %v953
    %978 = vmatprep.subr.bf16.mxu0 0
    %979 = vmatpush1.bf16.msra.mxu0 0
    %980 = vmatprep.subr.bf16.mxu0 0
    %981 = vmatpush1.bf16.msra.mxu0 0
    %982 = vmatprep.subr.bf16.mxu0 0
    %983 = vmatpush1.bf16.msra.mxu0 0
    %984 = vmatprep.subr.bf16.mxu0 0
    %985 = vmatpush1.bf16.msra.mxu0 0
    %986 = vmatprep.subr.bf16.mxu0 0
    %987 = vmatpush1.bf16.msra.mxu0 0
    %988 = vmatprep.subr.bf16.mxu0 0
    %989 = vmatpush1.bf16.msra.mxu0 0
    %990 = vmatprep.subr.bf16.mxu0 0
    %991 = vmatpush1.bf16.msra.mxu0 0
    %992 = vmatprep.subr.bf16.mxu0 0
    %993 = vmatpush1.bf16.msra.mxu0 0
    %994 = vmatprep.mubr.bf16.mxu0 0
    %995 = vmatmul.mubr.bf16.gmra.mrb[0].mxu0 %v893
    %v996 = vpop.f32.mrb[0].mxu0
    %v997 = vadd.f32 0.0, %v996
    %v998 = vpop.f32.mrb[0].mxu0
    %v999 = vpop.f32.mrb[0].mxu0
    %v1000 = vadd.f32 0.0, %v999
    %v1001 = vpop.f32.mrb[0].mxu0
    %1002 = vmatprep.mubr.bf16.mxu0 0
    %1003 = vmatmul.mubr.bf16.gmra.mrb[0].mxu0 %v894
    %v1004 = vpop.f32.mrb[0].mxu0
    %v1005 = vadd.f32 0.0, %v1004
    %v1006 = vpop.f32.mrb[0].mxu0
    %v1007 = vpop.f32.mrb[0].mxu0
    %v1008 = vadd.f32 0.0, %v1007
    %v1009 = vpop.f32.mrb[0].mxu0
    %1010 = vmatprep.mubr.bf16.mxu0 0
    %1011 = vmatmul.mubr.bf16.gmra.mrb[0].mxu0 %v895
    %v1012 = vpop.f32.mrb[0].mxu0
    %v1013 = vadd.f32 0.0, %v1012
    %v1014 = vpop.f32.mrb[0].mxu0
    %v1015 = vpop.f32.mrb[0].mxu0
    %v1016 = vadd.f32 0.0, %v1015
    %v1017 = vpop.f32.mrb[0].mxu0
    %1018 = vmatprep.mubr.bf16.mxu0 0
    %1019 = vmatmul.mubr.bf16.gmra.mrb[0].mxu0 %v896
    %v1020 = vpop.f32.mrb[0].mxu0
    %v1021 = vadd.f32 0.0, %v1020
    %v1022 = vpop.f32.mrb[0].mxu0
    %v1023 = vpop.f32.mrb[0].mxu0
    %v1024 = vadd.f32 0.0, %v1023
    %v1025 = vpop.f32.mrb[0].mxu0
    %1026 = vdwg.mxu0
    %v1027 = vpack.c.bf16 %v1000, %v997
    %v1028 = vpack.c.bf16 %v1008, %v1005
    %v1029 = vpack.c.bf16 %v1016, %v1013
    %v1030 = vpack.c.bf16 %v1024, %v1021
    %s1031 = scalar_lea.vmem [#allocation9], 128
    %v1032 = vld [vmem:[%s1031] sm:$0xf]
    %v1033 = vld [vmem:[%s1031 + $0x4] sm:$0xf]
    %v1034 = vld [vmem:[%s1031 + $0x8] sm:$0xf]
    %v1035 = vld [vmem:[%s1031 + $0xc] sm:$0xf]
    %v1036 = vld [vmem:[%s1031 + $0x10] sm:$0xf]
    %v1037 = vld [vmem:[%s1031 + $0x14] sm:$0xf]
    %v1038 = vld [vmem:[%s1031 + $0x18] sm:$0xf]
    %v1039 = vld [vmem:[%s1031 + $0x1c] sm:$0xf]
    %v1040 = vld [vmem:[%s1031 + $0x20] sm:$0xf]
    %v1041 = vld [vmem:[%s1031 + $0x24] sm:$0xf]
    %v1042 = vld [vmem:[%s1031 + $0x28] sm:$0xf]
    %v1043 = vld [vmem:[%s1031 + $0x2c] sm:$0xf]
    %v1044 = vld [vmem:[%s1031 + $0x30] sm:$0xf]
    %v1045 = vld [vmem:[%s1031 + $0x34] sm:$0xf]
    %v1046 = vld [vmem:[%s1031 + $0x38] sm:$0xf]
    %v1047 = vld [vmem:[%s1031 + $0x3c] sm:$0xf]
    %v1064 = vunpack.c.l.b16 %v1032
    %v1065 = vunpack.c.l.b16 %v1033
    %v1066 = vunpack.c.l.b16 %v1034
    %v1067 = vunpack.c.l.b16 %v1035
    %v1068 = vunpack.c.l.b16 %v1036
    %v1069 = vunpack.c.l.b16 %v1037
    %v1070 = vunpack.c.l.b16 %v1038
    %v1071 = vunpack.c.l.b16 %v1039
    %v1072 = vunpack.c.l.b16 %v1040
    %v1073 = vunpack.c.l.b16 %v1041
    %v1074 = vunpack.c.l.b16 %v1042
    %v1075 = vunpack.c.l.b16 %v1043
    %v1076 = vunpack.c.l.b16 %v1044
    %v1077 = vunpack.c.l.b16 %v1045
    %v1078 = vunpack.c.l.b16 %v1046
    %v1079 = vunpack.c.l.b16 %v1047
    %v1080 = vpack.c.b16 %v1065, %v1064
    %v1081 = vpack.c.b16 %v1067, %v1066
    %v1082 = vpack.c.b16 %v1069, %v1068
    %v1083 = vpack.c.b16 %v1071, %v1070
    %v1084 = vpack.c.b16 %v1073, %v1072
    %v1085 = vpack.c.b16 %v1075, %v1074
    %v1086 = vpack.c.b16 %v1077, %v1076
    %v1087 = vpack.c.b16 %v1079, %v1078
    %1096 = vmatprep.subr.bf16.mxu0 0
    %1097 = vmatpush1.bf16.msra.mxu0 %v1080
    %1098 = vmatprep.subr.bf16.mxu0 0
    %1099 = vmatpush1.bf16.msra.mxu0 %v1081
    %1100 = vmatprep.subr.bf16.mxu0 0
    %1101 = vmatpush1.bf16.msra.mxu0 %v1082
    %1102 = vmatprep.subr.bf16.mxu0 0
    %1103 = vmatpush1.bf16.msra.mxu0 %v1083
    %1104 = vmatprep.subr.bf16.mxu0 0
    %1105 = vmatpush1.bf16.msra.mxu0 %v1084
    %1106 = vmatprep.subr.bf16.mxu0 0
    %1107 = vmatpush1.bf16.msra.mxu0 %v1085
    %1108 = vmatprep.subr.bf16.mxu0 0
    %1109 = vmatpush1.bf16.msra.mxu0 %v1086
    %1110 = vmatprep.subr.bf16.mxu0 0
    %1111 = vmatpush1.bf16.msra.mxu0 %v1087
    %1112 = vmatprep.subr.bf16.mxu0 0
    %1113 = vmatpush1.bf16.msra.mxu0 0
    %1114 = vmatprep.subr.bf16.mxu0 0
    %1115 = vmatpush1.bf16.msra.mxu0 0
    %1116 = vmatprep.subr.bf16.mxu0 0
    %1117 = vmatpush1.bf16.msra.mxu0 0
    %1118 = vmatprep.subr.bf16.mxu0 0
    %1119 = vmatpush1.bf16.msra.mxu0 0
    %1120 = vmatprep.subr.bf16.mxu0 0
    %1121 = vmatpush1.bf16.msra.mxu0 0
    %1122 = vmatprep.subr.bf16.mxu0 0
    %1123 = vmatpush1.bf16.msra.mxu0 0
    %1124 = vmatprep.subr.bf16.mxu0 0
    %1125 = vmatpush1.bf16.msra.mxu0 0
    %1126 = vmatprep.subr.bf16.mxu0 0
    %1127 = vmatpush1.bf16.msra.mxu0 0
    %1128 = vmatprep.mubr.bf16.mxu0 0
    %1129 = vmatmul.mubr.bf16.gmra.mrb[0].mxu0 %v893
    %v1130 = vpop.f32.mrb[0].mxu0
    %v1131 = vadd.f32 0.0, %v1130
    %v1132 = vpop.f32.mrb[0].mxu0
    %v1133 = vpop.f32.mrb[0].mxu0
    %v1134 = vadd.f32 0.0, %v1133
    %v1135 = vpop.f32.mrb[0].mxu0
    %1136 = vmatprep.mubr.bf16.mxu0 0
    %1137 = vmatmul.mubr.bf16.gmra.mrb[0].mxu0 %v894
    %v1138 = vpop.f32.mrb[0].mxu0
    %v1139 = vadd.f32 0.0, %v1138
    %v1140 = vpop.f32.mrb[0].mxu0
    %v1141 = vpop.f32.mrb[0].mxu0
    %v1142 = vadd.f32 0.0, %v1141
    %v1143 = vpop.f32.mrb[0].mxu0
    %1144 = vmatprep.mubr.bf16.mxu0 0
    %1145 = vmatmul.mubr.bf16.gmra.mrb[0].mxu0 %v895
    %v1146 = vpop.f32.mrb[0].mxu0
    %v1147 = vadd.f32 0.0, %v1146
    %v1148 = vpop.f32.mrb[0].mxu0
    %v1149 = vpop.f32.mrb[0].mxu0
    %v1150 = vadd.f32 0.0, %v1149
    %v1151 = vpop.f32.mrb[0].mxu0
    %1152 = vmatprep.mubr.bf16.mxu0 0
    %1153 = vmatmul.mubr.bf16.gmra.mrb[0].mxu0 %v896
    %v1154 = vpop.f32.mrb[0].mxu0
    %v1155 = vadd.f32 0.0, %v1154
    %v1156 = vpop.f32.mrb[0].mxu0
    %v1157 = vpop.f32.mrb[0].mxu0
    %v1158 = vadd.f32 0.0, %v1157
    %v1159 = vpop.f32.mrb[0].mxu0
    %1160 = vdwg.mxu0
    %1161 = vmatprep.subr.bf16.mxu0 0
    %1162 = vmatpush1.bf16.msra.mxu0 %v1027
    %1163 = vmatprep.subr.bf16.mxu0 0
    %1164 = vmatpush1.bf16.msra.mxu0 %v1028
    %1165 = vmatprep.subr.bf16.mxu0 0
    %1166 = vmatpush1.bf16.msra.mxu0 %v1029
    %1167 = vmatprep.subr.bf16.mxu0 0
    %1168 = vmatpush1.bf16.msra.mxu0 %v1030
    %1169 = vmatprep.subr.bf16.mxu0 0
    %1170 = vmatpush1.bf16.msra.mxu0 0
    %1171 = vmatprep.subr.bf16.mxu0 0
    %1172 = vmatpush1.bf16.msra.mxu0 0
    %1173 = vmatprep.subr.bf16.mxu0 0
    %1174 = vmatpush1.bf16.msra.mxu0 0
    %1175 = vmatprep.subr.bf16.mxu0 0
    %1176 = vmatpush1.bf16.msra.mxu0 0
    %1177 = vmatprep.subr.bf16.mxu0 0
    %1178 = vmatpush1.bf16.msra.mxu0 0
    %1179 = vmatprep.subr.bf16.mxu0 0
    %1180 = vmatpush1.bf16.msra.mxu0 0
    %1181 = vmatprep.subr.bf16.mxu0 0
    %1182 = vmatpush1.bf16.msra.mxu0 0
    %1183 = vmatprep.subr.bf16.mxu0 0
    %1184 = vmatpush1.bf16.msra.mxu0 0
    %1185 = vmatprep.subr.bf16.mxu0 0
    %1186 = vmatpush1.bf16.msra.mxu0 0
    %1187 = vmatprep.subr.bf16.mxu0 0
    %1188 = vmatpush1.bf16.msra.mxu0 0
    %1189 = vmatprep.subr.bf16.mxu0 0
    %1190 = vmatpush1.bf16.msra.mxu0 0
    %1191 = vmatprep.subr.bf16.mxu0 0
    %1192 = vmatpush1.bf16.msra.mxu0 0
    %1193 = vmatprep.mubr.bf16.mxu0 0
    %1194 = vmatmul.mubr.bf16.gmra.mrb[0].mxu0 %v405
    %v1195 = vpop.f32.mrb[0].mxu0
    %v1196 = vadd.f32 %v1131, %v1195
    %v1197 = vpop.f32.mrb[0].mxu0
    %v1198 = vpop.f32.mrb[0].mxu0
    %v1199 = vadd.f32 %v1134, %v1198
    %v1200 = vpop.f32.mrb[0].mxu0
    %1201 = vmatprep.mubr.bf16.mxu0 0
    %1202 = vmatmul.mubr.bf16.gmra.mrb[0].mxu0 %v408
    %v1203 = vpop.f32.mrb[0].mxu0
    %v1204 = vadd.f32 %v1139, %v1203
    %v1205 = vpop.f32.mrb[0].mxu0
    %v1206 = vpop.f32.mrb[0].mxu0
    %v1207 = vadd.f32 %v1142, %v1206
    %v1208 = vpop.f32.mrb[0].mxu0
    %1209 = vmatprep.mubr.bf16.mxu0 0
    %1210 = vmatmul.mubr.bf16.gmra.mrb[0].mxu0 %v411
    %v1211 = vpop.f32.mrb[0].mxu0
    %v1212 = vadd.f32 %v1147, %v1211
    %v1213 = vpop.f32.mrb[0].mxu0
    %v1214 = vpop.f32.mrb[0].mxu0
    %v1215 = vadd.f32 %v1150, %v1214
    %v1216 = vpop.f32.mrb[0].mxu0
    %1217 = vmatprep.mubr.bf16.mxu0 0
    %1218 = vmatmul.mubr.bf16.gmra.mrb[0].mxu0 %v414
    %v1219 = vpop.f32.mrb[0].mxu0
    %v1220 = vadd.f32 %v1155, %v1219
    %v1221 = vpop.f32.mrb[0].mxu0
    %v1222 = vpop.f32.mrb[0].mxu0
    %v1223 = vadd.f32 %v1158, %v1222
    %v1224 = vpop.f32.mrb[0].mxu0
    %1225 = vdwg.mxu0
    %s1226 = scalar_lea.vmem %s4, 2
    %v1227 = vld [vmem:[%s1226] sm:$0x1]
    %v1229 = vlaneseq
    %v1230 = vshrl.u32 %v1229, 7
    %v1231 = vsub.s32 0, %v1230
    %v1232 = vrot.slane %v1227, %v1231
    %v1234 = vadd.f32 %v1196, %v1232
    %v1235 = vadd.f32 %v1199, %v1232
    %v1236 = vadd.f32 %v1204, %v1232
    %v1237 = vadd.f32 %v1207, %v1232
    %v1238 = vadd.f32 %v1212, %v1232
    %v1239 = vadd.f32 %v1215, %v1232
    %v1240 = vadd.f32 %v1220, %v1232
    %v1241 = vadd.f32 %v1223, %v1232
    %v1242 = vmax.f32 %v1234, 0.0
    %v1243 = vmax.f32 %v1235, 0.0
    %v1244 = vmax.f32 %v1236, 0.0
    %v1245 = vmax.f32 %v1237, 0.0
    %v1246 = vmax.f32 %v1238, 0.0
    %v1247 = vmax.f32 %v1239, 0.0
    %v1248 = vmax.f32 %v1240, 0.0
    %v1249 = vmax.f32 %v1241, 0.0
    %1250 = vst [vmem:[#allocation2] sm:$0xff] %v1242
    %1251 = vst [vmem:[#allocation2 + $0x8] sm:$0xff] %v1243
    %1252 = vst [vmem:[#allocation2 + $0x10] sm:$0xff] %v1244
    %1253 = vst [vmem:[#allocation2 + $0x18] sm:$0xff] %v1245
    %1254 = vst [vmem:[#allocation2 + $0x20] sm:$0xff] %v1246
    %1255 = vst [vmem:[#allocation2 + $0x28] sm:$0xff] %v1247
    %1256 = vst [vmem:[#allocation2 + $0x30] sm:$0xff] %v1248
    %1257 = vst [vmem:[#allocation2 + $0x38] sm:$0xff] %v1249
    %v1258 = vld [vmem:[#allocation2] sm:$0xff]
    %v1259 = vld [vmem:[#allocation2 + $0x8] sm:$0xff]
    %v1260 = vld [vmem:[#allocation2 + $0x10] sm:$0xff]
    %v1261 = vld [vmem:[#allocation2 + $0x18] sm:$0xff]
    %v1262 = vld [vmem:[#allocation2 + $0x20] sm:$0xff]
    %v1263 = vld [vmem:[#allocation2 + $0x28] sm:$0xff]
    %v1264 = vld [vmem:[#allocation2 + $0x30] sm:$0xff]
    %v1265 = vld [vmem:[#allocation2 + $0x38] sm:$0xff]
    %1266 = vst [vmem:[#allocation11] sm:$0xff] %v1258
    %1267 = vst [vmem:[#allocation11 + $0x8] sm:$0xff] %v1259
    %1268 = vst [vmem:[#allocation11 + $0x10] sm:$0xff] %v1260
    %1269 = vst [vmem:[#allocation11 + $0x18] sm:$0xff] %v1261
    %1270 = vst [vmem:[#allocation11 + $0x20] sm:$0xff] %v1262
    %1271 = vst [vmem:[#allocation11 + $0x28] sm:$0xff] %v1263
    %1272 = vst [vmem:[#allocation11 + $0x30] sm:$0xff] %v1264
    %1273 = vst [vmem:[#allocation11 + $0x38] sm:$0xff] %v1265
    // Predicated region
    $region38: #{tpu_custom_call.1} parent=1 // pred_check
      _
    $region39: #{tpu_custom_call.1} parent=1 // pred_check_branch
      %1275 = sbr.rel (0) target = $region41
    $region40: #{tpu_custom_call.1} parent=1 // pred_region
      %s1277 = ssub.s32 1024, 1024
      %1278 = vsyncadd [#allocation5], %s1277
      %s1279 = sshll.u32 [#allocation11], 4
      %s1280 = int_to_ptr.vmem [resolvable:$true] %s1279
      %1285 = dma.vmem_to_hbm [thread:$0]  %s1280, 1024, %s5, [#allocation5], 128, 128, 8
    $region41: #{tpu_custom_call.1} parent=1 // pred_fallthru
      _
    // Predicated region
    $region42: #{tpu_custom_call.1} parent=1 // pred_check
      _
    $region43: #{tpu_custom_call.1} parent=1 // pred_check_branch
      %1287 = sbr.rel (0) target = $region45
    $region44: #{tpu_custom_call.1} parent=1 // pred_region
      %1288 = dma.done [#allocation5], 1024
    $region45: #{tpu_custom_call.1} parent=1 // pred_fallthru
      _
    %1289 = vsyncpa [#allocation4], 1
    %1290 = vsyncpa [#allocation7], 1
    %1291 = vsyncpa [#allocation10], 1
    %1292 = vsyncpa [#allocation5], 1

</llo_original>
